<compile_context>
chip_gen: v7x
topology: tpu7x:2x2x1
jax: 0.10.0
libtpu: 0.0.40
codegen_flags: <defaults>
</compile_context>

<pallas_src>
import functools
import math

import jax
import jax.numpy as jnp
from jax import lax
from jax.experimental import pallas as pl
from jax.experimental.pallas import tpu as pltpu


def _build_pe_table(d_model: int, max_len: int) -> jnp.ndarray:
    """Deterministic sinusoidal PE table, identical to the PyTorch __init__."""
    position = jnp.arange(0, max_len, dtype=jnp.float32)[:, None]          # [L, 1]
    div_term = jnp.exp(
        jnp.arange(0, d_model, 2, dtype=jnp.float32) * (-math.log(10000.0) / d_model)
    )                                                                      # [D/2]
    args = position * div_term                                             # [L, D/2]
    pe = jnp.zeros((max_len, d_model), dtype=jnp.float32)
    pe = pe.at[:, 0::2].set(jnp.sin(args))
    pe = pe.at[:, 1::2].set(jnp.cos(args))
    return pe                                                              # [L, D]


def _pos_enc_kernel(seed_ref, x_ref, pe_ref, o_ref, *, p: float, training: bool,
                    batch: int):
    # x_ref/o_ref: [TS, B*D] VMEM; pe_ref: [TS, D] VMEM; seed_ref: [1] SMEM.
    x = x_ref[...]                                        # [TS, B*D]
    pe = pe_ref[...].astype(x.dtype)                      # [TS, D]
    pe_rep = jnp.tile(pe, (1, batch))                     # replicate over batch lanes
    y = x + pe_rep

    if training and p > 0.0:
        ts, bd = x_ref.shape
        # Global element index (unique per tile via program_id -> row offset).
        row0 = pl.program_id(0) * ts
        rows = lax.broadcasted_iota(jnp.int32, (ts, bd), 0) + row0
        cols = lax.broadcasted_iota(jnp.int32, (ts, bd), 1)
        idx = (rows * bd + cols).astype(jnp.uint32)

        # splitmix32-style hash of (index, seed): pure uint32 VPU ops, so it
        # lowers both on Mosaic/TPU and in interpret mode (hardware PRNG does not).
        seed = seed_ref[0].astype(jnp.uint32)
        h = idx + seed * jnp.uint32(0x9E3779B9)
        h = h + jnp.uint32(0x9E3779B9)
        h = (h ^ (h >> jnp.uint32(16))) * jnp.uint32(0x85EBCA6B)
        h = (h ^ (h >> jnp.uint32(13))) * jnp.uint32(0xC2B2AE35)
        h = h ^ (h >> jnp.uint32(16))

        # Integer-space threshold: keep with probability (1 - p).
        thresh = jnp.uint32(int(round(p * float(1 << 24))))
        keep = (h & jnp.uint32(0x00FFFFFF)) >= thresh
        scale = jnp.asarray(1.0 / (1.0 - p), dtype=y.dtype)
        y = jnp.where(keep, y * scale, jnp.zeros((), y.dtype))

    o_ref[...] = y.astype(o_ref.dtype)


def positional_encoding(x, pe_table, *, p=0.1, training=False, seed=0,
                        block_rows=None, donate_x=False):
    """x: [S, B, D]. pe_table: [max_len, D]. Returns [S, B, D] (x + PE, dropout)."""
    S, B, D = x.shape
    if pe_table.shape[0] < S:
        raise ValueError(f"sequence length {S} exceeds PE table max_len "
                         f"{pe_table.shape[0]}")
    if pe_table.shape[1] != D:
        raise ValueError("embed dim mismatch between x and pe_table")

    BD = B * D
    itemsize = jnp.dtype(x.dtype).itemsize

    x2 = x.reshape(S, BD)                                  # lane-dense layout
    pe_slice = pe_table[:S].astype(x.dtype)                # [S, D], match x dtype

    seed_arr = jnp.array([seed], dtype=jnp.int32)

    # Sequence tile: ~2 MiB of x per block (double-buffered x + out + pe stays
    # well inside v5e's 16 MiB scoped-VMEM default and v7x's 64 MiB physical).
    if block_rows is None:
        target_block_bytes = 2 * 1024 * 1024
        ts = max(1, target_block_bytes // (BD * itemsize))
        ts = min(S, ts)
    else:
        ts = min(S, int(block_rows))
    if ts < S:
        ts = max(8, (ts // 8) * 8)                         # sublane-aligned tiles
    grid = (pl.cdiv(S, ts),)

    kernel = functools.partial(_pos_enc_kernel, p=float(p),
                               training=bool(training), batch=B)

    bytes_accessed = 2 * S * BD * itemsize + S * D * jnp.dtype(pe_slice.dtype).itemsize
    cost = pl.CostEstimate(flops=S * BD, transcendentals=0,
                           bytes_accessed=bytes_accessed)

    out2 = pl.pallas_call(
        kernel,
        out_shape=jax.ShapeDtypeStruct((S, BD), x.dtype),
        grid=grid,
        in_specs=[
            pl.BlockSpec(memory_space=pltpu.MemorySpace.SMEM),     # seed scalar
            pl.BlockSpec((ts, BD), lambda i: (i, 0)),              # x tile
            pl.BlockSpec((ts, D), lambda i: (i, 0)),               # pe tile
        ],
        out_specs=pl.BlockSpec((ts, BD), lambda i: (i, 0)),
        compiler_params=pltpu.CompilerParams(
            dimension_semantics=("parallel",)),                    # 2 TCs on v7x
        cost_estimate=cost,
        input_output_aliases=({1: 0} if donate_x else {}),
    )(seed_arr, x2, pe_slice)

    return out2.reshape(S, B, D)


if __name__ == "__main__":
    S, B, D = 8, 2, 32          # seq len, batch, embed dim
    MAX_LEN = 64
    DROPOUT_P = 0.1

    key = jax.random.PRNGKey(0)
    x = jax.random.normal(key, (S, B, D), dtype=jnp.float32)

    pe_table = _build_pe_table(D, MAX_LEN)
    ref = x + pe_table[:S][:, None, :]

    # Eval mode: dropout is identity -> must match reference exactly.
    out_eval = positional_encoding(x, pe_table, p=DROPOUT_P, training=False)
    out_eval = jax.block_until_ready(out_eval)
    assert out_eval.shape == (S, B, D)
    assert jnp.allclose(out_eval, ref, atol=1e-6, rtol=1e-6), "mismatch vs reference"

    # Training mode: exercises the in-kernel dropout path.
    out_train = positional_encoding(x, pe_table, p=DROPOUT_P, training=True, seed=1234)
    out_train = jax.block_until_ready(out_train)
    assert out_train.shape == (S, B, D)
    # Every element is either dropped (0) or scaled by exactly 1/(1-p).
    scaled = ref / (1.0 - DROPOUT_P)
    ok = jnp.logical_or(jnp.isclose(out_train, 0.0, atol=1e-6),
                        jnp.isclose(out_train, scaled, atol=1e-5, rtol=1e-5))
    assert bool(jnp.all(ok)), "dropout output is neither 0 nor scaled(x+pe)"

    print("KERNEL_OK")
</pallas_src>

<mosaic_0001>
module attributes {stable_mosaic.version = 11 : i64} {
  func.func @_pos_enc_kernel(%arg0: i32, %arg1: memref<1xi32, #tpu.memory_space<smem>>, %arg2: memref<8x64xf32, #tpu.memory_space<vmem>>, %arg3: memref<8x32xf32, #tpu.memory_space<vmem>>, %arg4: memref<8x64xf32, #tpu.memory_space<vmem>>) attributes {dimension_semantics = [#tpu.dimension_semantics<parallel>], iteration_bounds = array<i64: 1>, scalar_prefetch = 0 : i64, scratch_operands = 0 : i64, tpu.core_type = #tpu.core_type<tc>, window_params = [{transform_indices = @transform_0, window_bounds = array<i64: 1>}, {transform_indices = @transform_1, window_bounds = array<i64: 8, 64>}, {transform_indices = @transform_2, window_bounds = array<i64: 8, 32>}, {transform_indices = @transform_3, window_bounds = array<i64: 8, 64>}]} {
    %c0 = arith.constant 0 : index
    %c0_0 = arith.constant 0 : index
    %0 = vector.load %arg2[%c0, %c0_0] : memref<8x64xf32, #tpu.memory_space<vmem>>, vector<8x64xf32>
    %c0_1 = arith.constant 0 : index
    %c0_2 = arith.constant 0 : index
    %1 = vector.load %arg3[%c0_1, %c0_2] : memref<8x32xf32, #tpu.memory_space<vmem>>, vector<8x32xf32>
    %2 = tpu.concatenate %1, %1 in 1 : vector<8x32xf32>, vector<8x32xf32> -> vector<8x64xf32>
    %3 = arith.addf %0, %2 : vector<8x64xf32>
    %c0_3 = arith.constant 0 : index
    %c0_4 = arith.constant 0 : index
    %4 = vector.load %arg4[%c0_3, %c0_4] : memref<8x64xf32, #tpu.memory_space<vmem>>, vector<8x64xf32>
    tpu.vector_store %arg4[%c0_3, %c0_4], %3 {strides = array<i32>} : memref<8x64xf32, #tpu.memory_space<vmem>>, vector<8x64xf32>,
    return
  }
  func.func @transform_0(%arg0: i32) -> i32 {
    %c0_i32 = arith.constant 0 : i32
    %c0_i32_0 = arith.constant 0 : i32
    return %c0_i32 : i32
  }
  func.func @transform_1(%arg0: i32) -> (i32, i32) {
    %c0_i32 = arith.constant 0 : i32
    %c0_i32_0 = arith.constant 0 : i32
    return %arg0, %c0_i32 : i32, i32
  }
  func.func @transform_2(%arg0: i32) -> (i32, i32) {
    %c0_i32 = arith.constant 0 : i32
    %c0_i32_0 = arith.constant 0 : i32
    return %arg0, %c0_i32 : i32, i32
  }
  func.func @transform_3(%arg0: i32) -> (i32, i32) {
    %c0_i32 = arith.constant 0 : i32
    %c0_i32_0 = arith.constant 0 : i32
    return %arg0, %c0_i32 : i32, i32
  }
}

</mosaic_0001>

<llo_original>
// kernel: tpu_custom_call.1
$region0: #{tpu_custom_call.1}
  #allocation0 [shape = 'u32[]', space=smem, size = 0x4, offset = 0x4, fixed_abs, tag = 'smem constant byte address 0x4 - core index']
  #allocation1 [shape = 'u32[144,128]{1,0:T(1,128)}', space=vmem, size = 0x12000, scoped, tag = 'internal scratch']
  #allocation2 [shape = 's32[1]{0:T(128)S(6)}', space=smem, size = 0x200, scoped, tag = 'scoped memory for tpu_custom_call.1']
  %s0 = inlined_call_operand.<no memory space> [shape: s32[1], index: 0, kind: input, shape index: {}]
  %s1 = inlined_call_operand.hbm [shape: f32[8,64], index: 1, kind: input, shape index: {}]
  %s2 = inlined_call_operand.hbm [shape: f32[8,32], index: 2, kind: input, shape index: {}]
  %s3 = inlined_call_operand.hbm [shape: f32[8,64], index: 3, kind: output, shape index: {}]
  %s4 = sld [smem:[#allocation0]]
  $region30: #{tpu_custom_call.1} parent=0
    _
  %s6 = ssub.s32 1, %s4
  %s7 = scalar_select 0, %s6, %s4
  %8 = sst [smem:[#allocation2]] %s0
  $region1: #{tpu_custom_call.1} parent=0
    #allocation3 [shape = 'u8[4096]{0}', space=vmem, size = 0x1000, scoped, tag = 'input window, operand 1, single buffered']
    #allocation4 [shape = 's32[1]{0}', space=sflag, size = 0x4, scoped, tag = 'scoped memory for tpu_custom_call.1']
    #allocation5 [shape = 's32[1]{0}', space=sflag, size = 0x4, scoped, tag = 'scoped memory for tpu_custom_call.1']
    #allocation6 [shape = 'u8[4096]{0}', space=vmem, size = 0x1000, scoped, tag = 'input window, operand 2, single buffered']
    #allocation7 [shape = 's32[1]{0}', space=sflag, size = 0x4, scoped, tag = 'scoped memory for tpu_custom_call.1']
    #allocation8 [shape = 'u8[4096]{0}', space=vmem, size = 0x1000, scoped, tag = 'output window, operand 0, single buffered']
    %9 = vsyncpa [#allocation4], 0
    %10 = vsyncpa [#allocation7], 0
    %11 = vsyncpa [#allocation5], 0
    // Predicated region
    $region2: #{tpu_custom_call.1} parent=1 // pred_check
      _
    $region3: #{tpu_custom_call.1} parent=1 // pred_check_branch
      %13 = sbr.rel (0) target = $region5
    $region4: #{tpu_custom_call.1} parent=1 // pred_region
      _
    $region5: #{tpu_custom_call.1} parent=1 // pred_fallthru
      _
    // Predicated region
    $region6: #{tpu_custom_call.1} parent=1 // pred_check
      _
    $region7: #{tpu_custom_call.1} parent=1 // pred_check_branch
      %15 = sbr.rel (0) target = $region9
    $region8: #{tpu_custom_call.1} parent=1 // pred_region
      %s17 = ssub.s32 128, 128
      %18 = vsyncadd [#allocation4], %s17
      %s20 = sshll.u32 [#allocation3], 4
      %s21 = int_to_ptr.vmem [resolvable:$true] %s20
      %23 = dma.hbm_to_vmem [thread:$0]  %s1, 128, %s21, [#allocation4]
    $region9: #{tpu_custom_call.1} parent=1 // pred_fallthru
      _
    // Predicated region
    $region10: #{tpu_custom_call.1} parent=1 // pred_check
      _
    $region11: #{tpu_custom_call.1} parent=1 // pred_check_branch
      %25 = sbr.rel (0) target = $region13
    $region12: #{tpu_custom_call.1} parent=1 // pred_region
      %s27 = ssub.s32 128, 128
      %28 = vsyncadd [#allocation7], %s27
      %s30 = sshll.u32 [#allocation6], 4
      %s31 = int_to_ptr.vmem [resolvable:$true] %s30
      %33 = dma.hbm_to_vmem [thread:$0]  %s2, 128, %s31, [#allocation7]
    $region13: #{tpu_custom_call.1} parent=1 // pred_fallthru
      _
    // Predicated region
    $region14: #{tpu_custom_call.1} parent=1 // pred_check
      _
    $region15: #{tpu_custom_call.1} parent=1 // pred_check_branch
      %35 = sbr.rel (0) target = $region17
    $region16: #{tpu_custom_call.1} parent=1 // pred_region
      %36 = dma.done [#allocation4], 128
    $region17: #{tpu_custom_call.1} parent=1 // pred_fallthru
      _
    // Predicated region
    $region18: #{tpu_custom_call.1} parent=1 // pred_check
      _
    $region19: #{tpu_custom_call.1} parent=1 // pred_check_branch
      %38 = sbr.rel (0) target = $region21
    $region20: #{tpu_custom_call.1} parent=1 // pred_region
      %39 = dma.done [#allocation7], 128
    $region21: #{tpu_custom_call.1} parent=1 // pred_fallthru
      _
    %v40 = vld [vmem:[#allocation3] sm:$0xff]
    %v41 = vld [vmem:[#allocation6] sm:$0xff]
    %43 = vrot.lane.b32.xlu0 %v41, 32
    %v44 = vpop.permute.xlu0 %43
    %vm46 = vcmask 261120
    %v47 = vsel %vm46, %v41, %v44
    %v48 = vadd.f32 %v40, %v47
    %vm49 = vcmask 523264
    %50 = vst.msk [vmem:[#allocation8] sm:$0xff] %vm49, %v48
    // Predicated region
    $region22: #{tpu_custom_call.1} parent=1 // pred_check
      _
    $region23: #{tpu_custom_call.1} parent=1 // pred_check_branch
      %52 = sbr.rel (0) target = $region25
    $region24: #{tpu_custom_call.1} parent=1 // pred_region
      %s54 = ssub.s32 128, 128
      %55 = vsyncadd [#allocation5], %s54
      %s57 = sshll.u32 [#allocation8], 4
      %s58 = int_to_ptr.vmem [resolvable:$true] %s57
      %60 = dma.vmem_to_hbm [thread:$0]  %s58, 128, %s3, [#allocation5]
    $region25: #{tpu_custom_call.1} parent=1 // pred_fallthru
      _
    // Predicated region
    $region26: #{tpu_custom_call.1} parent=1 // pred_check
      _
    $region27: #{tpu_custom_call.1} parent=1 // pred_check_branch
      %62 = sbr.rel (0) target = $region29
    $region28: #{tpu_custom_call.1} parent=1 // pred_region
      %63 = dma.done [#allocation5], 128
    $region29: #{tpu_custom_call.1} parent=1 // pred_fallthru
      _
    %64 = vsyncpa [#allocation4], 1
    %65 = vsyncpa [#allocation7], 1
    %66 = vsyncpa [#allocation5], 1

</llo_original>
